<compile_context>
chip_gen: v6e
topology: v6e:2x2x1
jax: 0.10.0
libtpu: 0.0.40
codegen_flags: <defaults>
</compile_context>

<pallas_src>
import functools
import random

import jax
import jax.numpy as jnp
from jax import lax
from jax.experimental import pallas as pl
from jax.experimental.pallas import tpu as pltpu


def _loss_kernel(pa_t_ref, pa_p_ref,     # (B, A)
                 pp_t_ref, pp_p_ref,     # (B, B)
                 aa_t_ref, aa_p_ref,     # (A, A)
                 pi_ref, pj_ref,         # (B, 1) int32 sampled indices
                 out_ref,                # SMEM (1, 1) scalar output
                 *, alpha, beta, gamma, theta):
    f32 = jnp.float32

    # ---- protein-anchor loss: L1 -> row sum -> mean over batch -------------
    pa_abs = jnp.abs(pa_p_ref[...].astype(f32) - pa_t_ref[...].astype(f32))
    b_pa = pa_abs.shape[0]
    protein_anchor_loss = jnp.sum(pa_abs) * (1.0 / b_pa)

    # ---- protein-protein loss: mean of off-diagonal L1 ----------------------
    B = pp_t_ref.shape[0]
    pp_t = pp_t_ref[...].astype(f32)
    pp_p = pp_p_ref[...].astype(f32)
    pp_abs = jnp.abs(pp_p - pp_t)
    rid_b = lax.broadcasted_iota(jnp.int32, (B, B), 0)
    cid_b = lax.broadcasted_iota(jnp.int32, (B, B), 1)
    pp_off = jnp.where(rid_b != cid_b, pp_abs, 0.0)
    protein_protein_loss = jnp.sum(pp_off) * (1.0 / (B * (B - 1)))

    # ---- anchor-anchor loss: mean of off-diagonal L1 -------------------------
    A = aa_t_ref.shape[0]
    aa_abs = jnp.abs(aa_p_ref[...].astype(f32) - aa_t_ref[...].astype(f32))
    rid_a = lax.broadcasted_iota(jnp.int32, (A, A), 0)
    cid_a = lax.broadcasted_iota(jnp.int32, (A, A), 1)
    aa_off = jnp.where(rid_a != cid_a, aa_abs, 0.0)
    anchor_anchor_loss = jnp.sum(aa_off) * (1.0 / (A * (A - 1)))

    # ---- triplet margin loss on protein-protein matrices ---------------------
    # Build a single {-1,0,+1} selection matrix from the sampled indices and
    # do just two lane-reductions:
    #   d_t = t_i - t_j ,  d_p = p_i - p_j
    # Original torch code:  pos = i if t_i > t_j else j  (ties -> j branch)
    #   loss_row = relu(pos_p - neg_p + (neg_t - pos_t)) = relu(sgn*d_p - |d_t|)
    # with sgn = +1 if d_t > 0 else -1  (ties give sgn=-1, matching torch).
    pi = pi_ref[...]                                   # (B, 1) int32
    pj = pj_ref[...]                                   # (B, 1) int32
    sel = (jnp.where(cid_b == pi, 1.0, 0.0)
           - jnp.where(cid_b == pj, 1.0, 0.0))         # (B, B) in {-1,0,1}
    d_t = jnp.sum(pp_t * sel, axis=1, keepdims=True)   # (B, 1)
    d_p = jnp.sum(pp_p * sel, axis=1, keepdims=True)   # (B, 1)
    sgn = jnp.where(d_t > 0.0, 1.0, -1.0)
    metric_loss = jnp.mean(jnp.maximum(sgn * d_p - jnp.abs(d_t), 0.0))

    out_ref[0, 0] = (alpha * protein_anchor_loss
                     + beta * protein_protein_loss
                     + gamma * metric_loss
                     + theta * anchor_anchor_loss)


def get_pos_neg_sample_indices(batch_size, seed=0):
    """Deterministic replica of TripletMarginLoss.get_pos_neg_index sampling."""
    rng = random.Random(seed)
    pis, pjs = [], []
    for i in range(batch_size):
        pi, pj = rng.sample(range(batch_size), 2)
        while pi == i or pj == i:
            pi, pj = rng.sample(range(batch_size), 2)
        pis.append(pi)
        pjs.append(pj)
    return jnp.asarray(pis, jnp.int32), jnp.asarray(pjs, jnp.int32)


def loss_func(pa_targets, pp_targets, aa_targets,
              pa_predicts, pp_predicts, aa_predicts,
              pi_idx, pj_idx,
              alpha=1.0, beta=1.0, gamma=1.0, theta=1.0):
    B = pp_targets.shape[0]
    A = aa_targets.shape[0]
    # Off-diagonal means divide by B*(B-1) / A*(A-1): require >= 2 rows.
    assert B > 1 and A > 1, "off-diagonal mean needs at least 2 rows"

    vmem = pl.BlockSpec(memory_space=pltpu.MemorySpace.VMEM)
    smem = pl.BlockSpec(memory_space=pltpu.MemorySpace.SMEM)

    kernel = functools.partial(
        _loss_kernel,
        alpha=float(alpha), beta=float(beta),
        gamma=float(gamma), theta=float(theta))

    out = pl.pallas_call(
        kernel,
        out_shape=jax.ShapeDtypeStruct((1, 1), jnp.float32),
        in_specs=[vmem] * 8,
        out_specs=smem,
    )(pa_targets, pa_predicts,
      pp_targets, pp_predicts,
      aa_targets, aa_predicts,
      pi_idx.astype(jnp.int32).reshape(B, 1),
      pj_idx.astype(jnp.int32).reshape(B, 1))
    return out[0, 0]


def loss_func_ref(pa_t, pp_t, aa_t, pa_p, pp_p, aa_p, pi_idx, pj_idx,
                  alpha=1.0, beta=1.0, gamma=1.0, theta=1.0):
    """Pure-JAX reference mirroring the PyTorch forward."""
    B = pp_t.shape[0]
    A = aa_t.shape[0]
    anchor_number = pa_t.shape[1]

    pa_loss = jnp.mean(jnp.sum(
        jnp.abs(pa_p - pa_t).reshape(-1, anchor_number), axis=1))

    mask_bb = ~jnp.eye(B, dtype=bool)
    pp_loss = jnp.mean(jnp.abs(pp_p - pp_t)[mask_bb])

    mask_aa = ~jnp.eye(A, dtype=bool)
    aa_loss = jnp.mean(jnp.abs(aa_p - aa_t)[mask_aa])

    rows = jnp.arange(B)
    t_i, t_j = pp_t[rows, pi_idx], pp_t[rows, pj_idx]
    p_i, p_j = pp_p[rows, pi_idx], pp_p[rows, pj_idx]
    cond = t_i > t_j
    pos_t = jnp.where(cond, t_i, t_j)
    neg_t = jnp.where(cond, t_j, t_i)
    pos_p = jnp.where(cond, p_i, p_j)
    neg_p = jnp.where(cond, p_j, p_i)
    metric = jnp.mean(jnp.maximum(pos_p - neg_p + (neg_t - pos_t), 0.0))

    return alpha * pa_loss + beta * pp_loss + gamma * metric + theta * aa_loss


if __name__ == "__main__":
    B = 8            # number of proteins (batch)
    ANCHORS = 16     # anchor_number

    key = jax.random.PRNGKey(0)
    k = jax.random.split(key, 6)
    pa_targets = jax.random.uniform(k[0], (B, ANCHORS), jnp.float32)
    pa_predicts = jax.random.uniform(k[1], (B, ANCHORS), jnp.float32)
    pp_targets = jax.random.uniform(k[2], (B, B), jnp.float32)
    pp_predicts = jax.random.uniform(k[3], (B, B), jnp.float32)
    aa_targets = jax.random.uniform(k[4], (ANCHORS, ANCHORS), jnp.float32)
    aa_predicts = jax.random.uniform(k[5], (ANCHORS, ANCHORS), jnp.float32)

    pi_idx, pj_idx = get_pos_neg_sample_indices(B, seed=0)

    total = loss_func(pa_targets, pp_targets, aa_targets,
                      pa_predicts, pp_predicts, aa_predicts,
                      pi_idx, pj_idx)
    total = jax.block_until_ready(total)

    ref = loss_func_ref(pa_targets, pp_targets, aa_targets,
                        pa_predicts, pp_predicts, aa_predicts,
                        pi_idx, pj_idx)
    assert jnp.allclose(total, ref, rtol=1e-5, atol=1e-5), (total, ref)

    print("KERNEL_OK")
</pallas_src>

<mosaic_0001>
module attributes {stable_mosaic.version = 11 : i64} {
  func.func @_loss_kernel(%arg0: memref<8x16xf32, #tpu.memory_space<vmem>>, %arg1: memref<8x16xf32, #tpu.memory_space<vmem>>, %arg2: memref<8x8xf32, #tpu.memory_space<vmem>>, %arg3: memref<8x8xf32, #tpu.memory_space<vmem>>, %arg4: memref<16x16xf32, #tpu.memory_space<vmem>>, %arg5: memref<16x16xf32, #tpu.memory_space<vmem>>, %arg6: memref<8x1xi32, #tpu.memory_space<vmem>>, %arg7: memref<8x1xi32, #tpu.memory_space<vmem>>, %arg8: memref<1x1xf32, #tpu.memory_space<smem>>) attributes {dimension_semantics = [], scalar_prefetch = 0 : i64, scratch_operands = 0 : i64, tpu.core_type = #tpu.core_type<tc>} {
    %c0 = arith.constant 0 : index
    %c0_0 = arith.constant 0 : index
    %0 = vector.load %arg1[%c0, %c0_0] : memref<8x16xf32, #tpu.memory_space<vmem>>, vector<8x16xf32>
    %c0_1 = arith.constant 0 : index
    %c0_2 = arith.constant 0 : index
    %1 = vector.load %arg0[%c0_1, %c0_2] : memref<8x16xf32, #tpu.memory_space<vmem>>, vector<8x16xf32>
    %2 = arith.subf %0, %1 : vector<8x16xf32>
    %3 = math.absf %2 : vector<8x16xf32>
    %4 = vector.shape_cast %3 : vector<8x16xf32> to vector<1x8x16xf32>
    %cst = arith.constant dense<0.000000e+00> : vector<1xf32>
    %5 = vector.multi_reduction <add>, %4, %cst [1, 2] : vector<1x8x16xf32> to vector<1xf32>
    %6 = vector.shape_cast %5 : vector<1xf32> to vector<1x1x1xf32>
    %7 = vector.extract %6[0, 0, 0] : f32 from vector<1x1x1xf32>
    %cst_3 = arith.constant 1.250000e-01 : f32
    %8 = arith.mulf %7, %cst_3 : f32
    %c0_4 = arith.constant 0 : index
    %c0_5 = arith.constant 0 : index
    %9 = vector.load %arg2[%c0_4, %c0_5] : memref<8x8xf32, #tpu.memory_space<vmem>>, vector<8x8xf32>
    %c0_6 = arith.constant 0 : index
    %c0_7 = arith.constant 0 : index
    %10 = vector.load %arg3[%c0_6, %c0_7] : memref<8x8xf32, #tpu.memory_space<vmem>>, vector<8x8xf32>
    %11 = arith.subf %10, %9 : vector<8x8xf32>
    %12 = math.absf %11 : vector<8x8xf32>
    %13 = tpu.iota {dimensions = array<i32: 0>} : vector<8x8xi32>
    %14 = tpu.iota {dimensions = array<i32: 1>} : vector<8x8xi32>
    %15 = arith.cmpi ne, %13, %14 : vector<8x8xi32>
    %cst_8 = arith.constant 0.000000e+00 : f32
    %16 = vector.broadcast %cst_8 : f32 to vector<8x8xf32>
    %17 = arith.select %15, %12, %16 : vector<8x8xi1>, vector<8x8xf32>
    %18 = vector.shape_cast %17 : vector<8x8xf32> to vector<1x8x8xf32>
    %cst_9 = arith.constant dense<0.000000e+00> : vector<1xf32>
    %19 = vector.multi_reduction <add>, %18, %cst_9 [1, 2] : vector<1x8x8xf32> to vector<1xf32>
    %20 = vector.shape_cast %19 : vector<1xf32> to vector<1x1x1xf32>
    %21 = vector.extract %20[0, 0, 0] : f32 from vector<1x1x1xf32>
    %cst_10 = arith.constant 0.0178571437 : f32
    %22 = arith.mulf %21, %cst_10 : f32
    %c0_11 = arith.constant 0 : index
    %c0_12 = arith.constant 0 : index
    %23 = vector.load %arg5[%c0_11, %c0_12] : memref<16x16xf32, #tpu.memory_space<vmem>>, vector<16x16xf32>
    %c0_13 = arith.constant 0 : index
    %c0_14 = arith.constant 0 : index
    %24 = vector.load %arg4[%c0_13, %c0_14] : memref<16x16xf32, #tpu.memory_space<vmem>>, vector<16x16xf32>
    %25 = arith.subf %23, %24 : vector<16x16xf32>
    %26 = math.absf %25 : vector<16x16xf32>
    %27 = tpu.iota {dimensions = array<i32: 0>} : vector<16x16xi32>
    %28 = tpu.iota {dimensions = array<i32: 1>} : vector<16x16xi32>
    %29 = arith.cmpi ne, %27, %28 : vector<16x16xi32>
    %cst_15 = arith.constant 0.000000e+00 : f32
    %30 = vector.broadcast %cst_15 : f32 to vector<16x16xf32>
    %31 = arith.select %29, %26, %30 : vector<16x16xi1>, vector<16x16xf32>
    %32 = vector.shape_cast %31 : vector<16x16xf32> to vector<1x16x16xf32>
    %cst_16 = arith.constant dense<0.000000e+00> : vector<1xf32>
    %33 = vector.multi_reduction <add>, %32, %cst_16 [1, 2] : vector<1x16x16xf32> to vector<1xf32>
    %34 = vector.shape_cast %33 : vector<1xf32> to vector<1x1x1xf32>
    %35 = vector.extract %34[0, 0, 0] : f32 from vector<1x1x1xf32>
    %cst_17 = arith.constant 0.00416666688 : f32
    %36 = arith.mulf %35, %cst_17 : f32
    %c0_18 = arith.constant 0 : index
    %c0_19 = arith.constant 0 : index
    %37 = vector.load %arg6[%c0_18, %c0_19] : memref<8x1xi32, #tpu.memory_space<vmem>>, vector<8x1xi32>
    %c0_20 = arith.constant 0 : index
    %c0_21 = arith.constant 0 : index
    %38 = vector.load %arg7[%c0_20, %c0_21] : memref<8x1xi32, #tpu.memory_space<vmem>>, vector<8x1xi32>
    %39 = vector.broadcast %37 : vector<8x1xi32> to vector<8x8xi32>
    %40 = arith.cmpi eq, %14, %39 : vector<8x8xi32>
    %cst_22 = arith.constant 1.000000e+00 : f32
    %cst_23 = arith.constant 0.000000e+00 : f32
    %41 = vector.broadcast %cst_22 : f32 to vector<8x8xf32>
    %42 = vector.broadcast %cst_23 : f32 to vector<8x8xf32>
    %43 = arith.select %40, %41, %42 : vector<8x8xi1>, vector<8x8xf32>
    %44 = vector.broadcast %38 : vector<8x1xi32> to vector<8x8xi32>
    %45 = arith.cmpi eq, %14, %44 : vector<8x8xi32>
    %cst_24 = arith.constant 1.000000e+00 : f32
    %cst_25 = arith.constant 0.000000e+00 : f32
    %46 = vector.broadcast %cst_24 : f32 to vector<8x8xf32>
    %47 = vector.broadcast %cst_25 : f32 to vector<8x8xf32>
    %48 = arith.select %45, %46, %47 : vector<8x8xi1>, vector<8x8xf32>
    %49 = arith.subf %43, %48 : vector<8x8xf32>
    %50 = arith.mulf %9, %49 : vector<8x8xf32>
    %cst_26 = arith.constant dense<0.000000e+00> : vector<8xf32>
    %51 = vector.multi_reduction <add>, %50, %cst_26 [1] : vector<8x8xf32> to vector<8xf32>
    %52 = vector.shape_cast %51 : vector<8xf32> to vector<8x1xf32>
    %53 = arith.mulf %10, %49 : vector<8x8xf32>
    %cst_27 = arith.constant dense<0.000000e+00> : vector<8xf32>
    %54 = vector.multi_reduction <add>, %53, %cst_27 [1] : vector<8x8xf32> to vector<8xf32>
    %55 = vector.shape_cast %54 : vector<8xf32> to vector<8x1xf32>
    %cst_28 = arith.constant 0.000000e+00 : f32
    %56 = vector.broadcast %cst_28 : f32 to vector<8x1xf32>
    %57 = arith.cmpf ogt, %52, %56 : vector<8x1xf32>
    %cst_29 = arith.constant 1.000000e+00 : f32
    %cst_30 = arith.constant -1.000000e+00 : f32
    %58 = vector.broadcast %cst_29 : f32 to vector<8x1xf32>
    %59 = vector.broadcast %cst_30 : f32 to vector<8x1xf32>
    %60 = arith.select %57, %58, %59 : vector<8x1xi1>, vector<8x1xf32>
    %61 = arith.mulf %60, %55 : vector<8x1xf32>
    %62 = math.absf %52 : vector<8x1xf32>
    %63 = arith.subf %61, %62 : vector<8x1xf32>
    %cst_31 = arith.constant 0.000000e+00 : f32
    %64 = vector.broadcast %cst_31 : f32 to vector<8x1xf32>
    %65 = arith.maximumf %63, %64 : vector<8x1xf32>
    %66 = vector.shape_cast %65 : vector<8x1xf32> to vector<1x8x1xf32>
    %cst_32 = arith.constant dense<0.000000e+00> : vector<1xf32>
    %67 = vector.multi_reduction <add>, %66, %cst_32 [1, 2] : vector<1x8x1xf32> to vector<1xf32>
    %68 = vector.shape_cast %67 : vector<1xf32> to vector<1x1x1xf32>
    %69 = vector.extract %68[0, 0, 0] : f32 from vector<1x1x1xf32>
    %cst_33 = arith.constant 8.000000e+00 : f32
    %70 = arith.divf %69, %cst_33 : f32
    %cst_34 = arith.constant 1.000000e+00 : f32
    %71 = arith.mulf %cst_34, %8 : f32
    %cst_35 = arith.constant 1.000000e+00 : f32
    %72 = arith.mulf %cst_35, %22 : f32
    %73 = arith.addf %71, %72 : f32
    %cst_36 = arith.constant 1.000000e+00 : f32
    %74 = arith.mulf %cst_36, %70 : f32
    %75 = arith.addf %73, %74 : f32
    %cst_37 = arith.constant 1.000000e+00 : f32
    %76 = arith.mulf %cst_37, %36 : f32
    %77 = arith.addf %75, %76 : f32
    %c0_38 = arith.constant 0 : index
    %c0_39 = arith.constant 0 : index
    %78 = memref.load %arg8[%c0_38, %c0_39] : memref<1x1xf32, #tpu.memory_space<smem>>
    memref.store %77, %arg8[%c0_38, %c0_39] : memref<1x1xf32, #tpu.memory_space<smem>>
    return
  }
}

</mosaic_0001>

<llo_original>
// kernel: tpu_custom_call.1
$region0: #{tpu_custom_call.1}
  #allocation0 [shape = 'u32[]', space=smem, size = 0x4, offset = 0x4, fixed_abs, tag = 'smem constant byte address 0x4 - core index']
  #allocation1 [shape = 'u32[144,128]{1,0:T(1,128)}', space=vmem, size = 0x12000, scoped, tag = 'internal scratch']
  %s0 = inlined_call_operand.vmem [shape: f32[8,16], index: 0, kind: input, shape index: {}]
  %s1 = inlined_call_operand.hbm [shape: f32[8,16], index: 1, kind: input, shape index: {}]
  %s2 = inlined_call_operand.hbm [shape: f32[8,8], index: 2, kind: input, shape index: {}]
  %s3 = inlined_call_operand.hbm [shape: f32[8,8], index: 3, kind: input, shape index: {}]
  %s4 = inlined_call_operand.vmem [shape: f32[16,16], index: 4, kind: input, shape index: {}]
  %s5 = inlined_call_operand.hbm [shape: f32[16,16], index: 5, kind: input, shape index: {}]
  %s6 = inlined_call_operand.vmem [shape: s32[8,1], index: 6, kind: input, shape index: {}]
  %s7 = inlined_call_operand.vmem [shape: s32[8,1], index: 7, kind: input, shape index: {}]
  %s8 = inlined_call_operand.hbm [shape: f32[1,1], index: 8, kind: output, shape index: {}]
  %s9 = sld [smem:[#allocation0]]
  $region58: #{tpu_custom_call.1} parent=0
    _
  %s11 = ssub.s32 1, %s9
  %s12 = scalar_select 0, %s11, %s9
  $region1: #{tpu_custom_call.1} parent=0
    #allocation2 [shape = 'u8[4096]{0}', space=vmem, size = 0x1000, scoped, tag = 'input window, operand 1, single buffered']
    #allocation3 [shape = 's32[1]{0}', space=sflag, size = 0x4, scoped, tag = 'scoped memory for tpu_custom_call.1']
    #allocation4 [shape = 's32[1]{0}', space=sflag, size = 0x4, scoped, tag = 'scoped memory for tpu_custom_call.1']
    #allocation5 [shape = 'u8[4096]{0}', space=vmem, size = 0x1000, scoped, tag = 'input window, operand 2, single buffered']
    #allocation6 [shape = 's32[1]{0}', space=sflag, size = 0x4, scoped, tag = 'scoped memory for tpu_custom_call.1']
    #allocation7 [shape = 'u8[4096]{0}', space=vmem, size = 0x1000, scoped, tag = 'input window, operand 3, single buffered']
    #allocation8 [shape = 'u8[8192]{0}', space=vmem, size = 0x2000, scoped, tag = 'input window, operand 5, single buffered']
    #allocation9 [shape = 's32[1]{0}', space=sflag, size = 0x4, scoped, tag = 'scoped memory for tpu_custom_call.1']
    #allocation10 [shape = 'u8[512]{0}', space=smem, size = 0x200, scoped, tag = 'output window, operand 0, single buffered']
    %13 = vsyncpa [#allocation3], 0
    %14 = vsyncpa [#allocation6], 0
    %15 = vsyncpa [#allocation9], 0
    %16 = vsyncpa [#allocation4], 0
    // Predicated region
    $region2: #{tpu_custom_call.1} parent=1 // pred_check
      _
    $region3: #{tpu_custom_call.1} parent=1 // pred_check_branch
      %18 = sbr.rel (0) target = $region5
    $region4: #{tpu_custom_call.1} parent=1 // pred_region
      _
    $region5: #{tpu_custom_call.1} parent=1 // pred_fallthru
      _
    // Predicated region
    $region6: #{tpu_custom_call.1} parent=1 // pred_check
      _
    $region7: #{tpu_custom_call.1} parent=1 // pred_check_branch
      %20 = sbr.rel (0) target = $region9
    $region8: #{tpu_custom_call.1} parent=1 // pred_region
      %s22 = ssub.s32 128, 128
      %23 = vsyncadd [#allocation3], %s22
      %s25 = sshll.u32 [#allocation2], 4
      %s26 = int_to_ptr.vmem [resolvable:$true] %s25
      %28 = dma.hbm_to_vmem [thread:$0]  %s1, 128, %s26, [#allocation3]
    $region9: #{tpu_custom_call.1} parent=1 // pred_fallthru
      _
    // Predicated region
    $region10: #{tpu_custom_call.1} parent=1 // pred_check
      _
    $region11: #{tpu_custom_call.1} parent=1 // pred_check_branch
      %30 = sbr.rel (0) target = $region13
    $region12: #{tpu_custom_call.1} parent=1 // pred_region
      %s32 = ssub.s32 128, 128
      %33 = vsyncadd [#allocation6], %s32
      %s35 = sshll.u32 [#allocation5], 4
      %s36 = int_to_ptr.vmem [resolvable:$true] %s35
      %38 = dma.hbm_to_vmem [thread:$0]  %s2, 128, %s36, [#allocation6]
    $region13: #{tpu_custom_call.1} parent=1 // pred_fallthru
      _
    // Predicated region
    $region14: #{tpu_custom_call.1} parent=1 // pred_check
      _
    $region15: #{tpu_custom_call.1} parent=1 // pred_check_branch
      %40 = sbr.rel (0) target = $region17
    $region16: #{tpu_custom_call.1} parent=1 // pred_region
      %s42 = ssub.s32 128, 128
      %43 = vsyncadd [#allocation6], %s42
      %s45 = sshll.u32 [#allocation7], 4
      %s46 = int_to_ptr.vmem [resolvable:$true] %s45
      %48 = dma.hbm_to_vmem [thread:$0]  %s3, 128, %s46, [#allocation6]
    $region17: #{tpu_custom_call.1} parent=1 // pred_fallthru
      _
    // Predicated region
    $region18: #{tpu_custom_call.1} parent=1 // pred_check
      _
    $region19: #{tpu_custom_call.1} parent=1 // pred_check_branch
      %50 = sbr.rel (0) target = $region21
    $region20: #{tpu_custom_call.1} parent=1 // pred_region
      _
    $region21: #{tpu_custom_call.1} parent=1 // pred_fallthru
      _
    // Predicated region
    $region22: #{tpu_custom_call.1} parent=1 // pred_check
      _
    $region23: #{tpu_custom_call.1} parent=1 // pred_check_branch
      %52 = sbr.rel (0) target = $region25
    $region24: #{tpu_custom_call.1} parent=1 // pred_region
      %s54 = ssub.s32 256, 256
      %55 = vsyncadd [#allocation9], %s54
      %s56 = sshll.u32 [#allocation8], 4
      %s57 = int_to_ptr.vmem [resolvable:$true] %s56
      %62 = dma.hbm_to_vmem [thread:$0]  %s5, 256, %s57, [#allocation9], 128, 128, 8
    $region25: #{tpu_custom_call.1} parent=1 // pred_fallthru
      _
    // Predicated region
    $region26: #{tpu_custom_call.1} parent=1 // pred_check
      _
    $region27: #{tpu_custom_call.1} parent=1 // pred_check_branch
      %64 = sbr.rel (0) target = $region29
    $region28: #{tpu_custom_call.1} parent=1 // pred_region
      _
    $region29: #{tpu_custom_call.1} parent=1 // pred_fallthru
      _
    // Predicated region
    $region30: #{tpu_custom_call.1} parent=1 // pred_check
      _
    $region31: #{tpu_custom_call.1} parent=1 // pred_check_branch
      %66 = sbr.rel (0) target = $region33
    $region32: #{tpu_custom_call.1} parent=1 // pred_region
      _
    $region33: #{tpu_custom_call.1} parent=1 // pred_fallthru
      _
    // Predicated region
    $region34: #{tpu_custom_call.1} parent=1 // pred_check
      _
    $region35: #{tpu_custom_call.1} parent=1 // pred_check_branch
      %68 = sbr.rel (0) target = $region37
    $region36: #{tpu_custom_call.1} parent=1 // pred_region
      %69 = dma.done [#allocation3], 128
    $region37: #{tpu_custom_call.1} parent=1 // pred_fallthru
      _
    // Predicated region
    $region38: #{tpu_custom_call.1} parent=1 // pred_check
      _
    $region39: #{tpu_custom_call.1} parent=1 // pred_check_branch
      %71 = sbr.rel (0) target = $region41
    $region40: #{tpu_custom_call.1} parent=1 // pred_region
      %72 = dma.done [#allocation6], 128
    $region41: #{tpu_custom_call.1} parent=1 // pred_fallthru
      _
    // Predicated region
    $region42: #{tpu_custom_call.1} parent=1 // pred_check
      _
    $region43: #{tpu_custom_call.1} parent=1 // pred_check_branch
      %74 = sbr.rel (0) target = $region45
    $region44: #{tpu_custom_call.1} parent=1 // pred_region
      %75 = dma.done [#allocation6], 128
    $region45: #{tpu_custom_call.1} parent=1 // pred_fallthru
      _
    // Predicated region
    $region46: #{tpu_custom_call.1} parent=1 // pred_check
      _
    $region47: #{tpu_custom_call.1} parent=1 // pred_check_branch
      %77 = sbr.rel (0) target = $region49
    $region48: #{tpu_custom_call.1} parent=1 // pred_region
      %78 = dma.done [#allocation9], 256
    $region49: #{tpu_custom_call.1} parent=1 // pred_fallthru
      _
    %v79 = vld [vmem:[#allocation2] sm:$0xff]
    %v80 = vld [vmem:[%s0] sm:$0xff]
    %v81 = vsub.f32 %v79, %v80
    %v82 = vand.u32 2147483647, %v81
    %vm83 = vcmask 130048
    %v84 = vsel %vm83, %v82, 0.0
    %85 = vadd.xlane.f32.xlu0 %v84
    %v86 = vpop.xlane.xlu0 %85
    %v87 = vrot.slane %v86, 4
    %v88 = vadd.f32 %v86, %v87
    %v89 = vrot.slane %v88, 2
    %v90 = vadd.f32 %v88, %v89
    %v91 = vrot.slane %v90, 1
    %v92 = vadd.f32 %v90, %v91
    %s93 = vtos %v92
    %s94 = smul.f32 %s93, 0.125
    %v95 = vld [vmem:[#allocation5] sm:$0xff]
    %v96 = vld [vmem:[#allocation7] sm:$0xff]
    %v97 = vsub.f32 %v96, %v95
    %v98 = vand.u32 2147483647, %v97
    %v99 = vlaneseq
    %v100 = vshrl.u32 %v99, 7
    %v101 = vlaneseq
    %v102 = vand.u32 %v101, 127
    %vm103 = vcmp.ne.s32.totalorder %v100, %v102
    %v104 = vsel %vm103, %v98, 0.0
    %vm105 = vcmask 64512
    %v106 = vsel %vm105, %v104, 0.0
    %107 = vadd.xlane.f32.xlu0 %v106
    %v108 = vpop.xlane.xlu0 %107
    %v109 = vrot.slane %v108, 4
    %v110 = vadd.f32 %v108, %v109
    %v111 = vrot.slane %v110, 2
    %v112 = vadd.f32 %v110, %v111
    %v113 = vrot.slane %v112, 1
    %v114 = vadd.f32 %v112, %v113
    %s115 = vtos %v114
    %s116 = smul.f32 %s115, 0.017857144
    %v117 = vld [vmem:[#allocation8] sm:$0xff]
    %v118 = vld [vmem:[#allocation8 + $0x8] sm:$0xff]
    %v119 = vld [vmem:[%s4] sm:$0xff]
    %v120 = vld [vmem:[%s4 + $0x8] sm:$0xff]
    %v121 = vsub.f32 %v117, %v119
    %v122 = vsub.f32 %v118, %v120
    %v123 = vand.u32 2147483647, %v121
    %v124 = vand.u32 2147483647, %v122
    %v125 = vadd.s32 %v100, 8
    %vm126 = vcmp.ne.s32.totalorder %v125, %v102
    %v127 = vsel %vm103, %v123, 0.0
    %v128 = vsel %vm126, %v124, 0.0
    %v129 = vsel %vm83, %v127, 0.0
    %v130 = vsel %vm83, %v128, 0.0
    %v131 = vadd.f32 %v129, %v130
    %132 = vadd.xlane.f32.xlu0 %v131
    %v133 = vpop.xlane.xlu0 %132
    %v134 = vrot.slane %v133, 4
    %v135 = vadd.f32 %v133, %v134
    %v136 = vrot.slane %v135, 2
    %v137 = vadd.f32 %v135, %v136
    %v138 = vrot.slane %v137, 1
    %v139 = vadd.f32 %v137, %v138
    %s140 = vtos %v139
    %s141 = smul.f32 %s140, 0.004166667
    %v142 = vld [vmem:[%s6] sm:$0xff]
    %v143 = vld [vmem:[%s7] sm:$0xff]
    %144 = vset.pattern.permute.xlu0 0
    %145 = vperm.xlu0 %144, %v142
    %v146 = vpop.permute.xlu0 %145
    %vm147 = vcmp.eq.s32.totalorder %v102, %v146
    %v148 = vsel %vm147, 1.0, 0.0
    %149 = vset.pattern.permute.xlu0 0
    %150 = vperm.xlu0 %149, %v143
    %v151 = vpop.permute.xlu0 %150
    %vm152 = vcmp.eq.s32.totalorder %v102, %v151
    %v153 = vsel %vm152, 1.0, 0.0
    %v154 = vsub.f32 %v148, %v153
    %v155 = vmul.f32 %v95, %v154
    %v156 = vsel %vm105, %v155, 0.0
    %157 = vadd.xlane.f32.xlu0 %v156
    %v158 = vpop.xlane.xlu0 %157
    %v159 = vmul.f32 %v96, %v154
    %v160 = vsel %vm105, %v159, 0.0
    %161 = vadd.xlane.f32.xlu0 %v160
    %v162 = vpop.xlane.xlu0 %161
    %vm163 = vcmp.gt.f32.partialorder %v158, 0.0
    %v164 = vsel %vm163, 1.0, -1.0
    %v165 = vmul.f32 %v164, %v162
    %v166 = vand.u32 2147483647, %v158
    %v167 = vsub.f32 %v165, %v166
    %v168 = vmax.f32 %v167, 0.0
    %vm169 = vcmask 7168
    %v170 = vsel %vm169, %v168, 0.0
    %171 = vadd.xlane.f32.xlu0 %v170
    %v172 = vpop.xlane.xlu0 %171
    %v173 = vrot.slane %v172, 4
    %v174 = vadd.f32 %v172, %v173
    %v175 = vrot.slane %v174, 2
    %v176 = vadd.f32 %v174, %v175
    %v177 = vrot.slane %v176, 1
    %v178 = vadd.f32 %v176, %v177
    %s179 = vtos %v178
    %v180 = vrcp.pop 8.0
    %s181 = vtos %v180
    %s182 = smul.f32 %s179, %s181
    %s183 = sadd.f32 %s94, %s116
    %s184 = sadd.f32 %s183, %s182
    %s185 = sadd.f32 %s184, %s141
    %s186 = scalar_lea.smem [#allocation10], 0
    %187 = sst [smem:[%s186]] %s185
    // Predicated region
    $region50: #{tpu_custom_call.1} parent=1 // pred_check
      _
    $region51: #{tpu_custom_call.1} parent=1 // pred_check_branch
      %189 = sbr.rel (0) target = $region53
    $region52: #{tpu_custom_call.1} parent=1 // pred_region
      %s191 = ssub.s32 16, 16
      %192 = vsyncadd [#allocation4], %s191
      %195 = dma.smem_to_hbm [#allocation10], 16, %s8, [#allocation4]
    $region53: #{tpu_custom_call.1} parent=1 // pred_fallthru
      _
    // Predicated region
    $region54: #{tpu_custom_call.1} parent=1 // pred_check
      _
    $region55: #{tpu_custom_call.1} parent=1 // pred_check_branch
      %197 = sbr.rel (0) target = $region57
    $region56: #{tpu_custom_call.1} parent=1 // pred_region
      %198 = dma.done [#allocation4], 16
    $region57: #{tpu_custom_call.1} parent=1 // pred_fallthru
      _
    %199 = sfence
    %200 = vsyncpa [#allocation3], 1
    %201 = vsyncpa [#allocation6], 1
    %202 = vsyncpa [#allocation9], 1
    %203 = vsyncpa [#allocation4], 1

</llo_original>
